<compile_context>
chip_gen: v6e
topology: v6e:2x2x1
jax: 0.10.0
libtpu: 0.0.40
codegen_flags: <defaults>
</compile_context>

<pallas_src>
import functools
import math

import jax
import jax.numpy as jnp
from jax.experimental import pallas as pl
from jax.experimental.pallas import tpu as pltpu

_BN_EPS = 1e-5
_LANE = 128
_TM_CAP = 1024  # rows; keeps VMEM footprint portable across v5e/v6e/v7x.


def _round_up(v, m):
    return ((v + m - 1) // m) * m


# ------------------------------- Pallas kernel --------------------------------

def _mlp_kernel(x_ref,
                w1_ref, b1_ref, w2_ref, b2_ref,
                w3_ref, b3_ref, w4_ref, b4_ref,
                o_ref):
    """Fused [Linear(+folded BN) -> ReLU] x 4 on one batch tile."""

    def linear_relu(h, w_ref, b_ref):
        y = jnp.dot(h, w_ref[...],                       # bf16 x bf16 on MXU
                    preferred_element_type=jnp.float32)  # f32 accumulate
        return jnp.maximum(y + b_ref[...], 0.0)          # bias + ReLU (f32 VPU)

    h = x_ref[...].astype(jnp.bfloat16)                  # no-op if x is bf16
    h = linear_relu(h, w1_ref, b1_ref).astype(jnp.bfloat16)
    h = linear_relu(h, w2_ref, b2_ref).astype(jnp.bfloat16)
    h = linear_relu(h, w3_ref, b3_ref).astype(jnp.bfloat16)
    h = linear_relu(h, w4_ref, b4_ref)
    o_ref[...] = h.astype(o_ref.dtype)                   # lane-dense bf16 store


# --------------------------- cached pallas_call build --------------------------

@functools.lru_cache(maxsize=None)
def _build_forward(mp, tm, d, h1p, h2p, h3p, ncp):
    grid = (mp // tm,)

    def row(i):        # batch-tiled operands
        return (i, 0)

    def const(i):      # parameters: same block every step -> kept resident
        return (0, 0)

    mm_elems = d * h1p + h1p * h2p + h2p * h3p + h3p * ncp
    flops = 2 * mp * mm_elems
    bytes_accessed = (2 * mp * (d + ncp)              # bf16 activations in/out
                      + 2 * mm_elems                  # bf16 weights
                      + 4 * (h1p + h2p + h3p + ncp))  # f32 biases

    call = pl.pallas_call(
        _mlp_kernel,
        out_shape=jax.ShapeDtypeStruct((mp, ncp), jnp.bfloat16),
        grid=grid,
        in_specs=[
            pl.BlockSpec((tm, d), row),
            # layer 1: (bn1 folded) denseL1
            pl.BlockSpec((d, h1p), const), pl.BlockSpec((1, h1p), const),
            # layer 2: (bn2 folded) denseL2
            pl.BlockSpec((h1p, h2p), const), pl.BlockSpec((1, h2p), const),
            # layer 3: (bn3 folded) denseL3
            pl.BlockSpec((h2p, h3p), const), pl.BlockSpec((1, h3p), const),
            # layer 4: (bn4 folded) denseL4 (output padded to ncp lanes)
            pl.BlockSpec((h3p, ncp), const), pl.BlockSpec((1, ncp), const),
        ],
        out_specs=pl.BlockSpec((tm, ncp), row),
        compiler_params=pltpu.CompilerParams(
            dimension_semantics=("parallel",)),
        cost_estimate=pl.CostEstimate(
            flops=flops, transcendentals=0, bytes_accessed=bytes_accessed),
    )
    return jax.jit(call)


# ------------------------------- parameters ------------------------------------

def _bn_affine(dim):
    # Eval-mode BatchNorm1d with default params/statistics:
    # gamma=1, beta=0, running_mean=0, running_var=1.
    gamma = jnp.ones((dim,), jnp.float32)
    beta = jnp.zeros((dim,), jnp.float32)
    mean = jnp.zeros((dim,), jnp.float32)
    var = jnp.ones((dim,), jnp.float32)
    scale = gamma / jnp.sqrt(var + _BN_EPS)
    shift = beta - mean * scale
    return scale, shift


def _linear_init(key, fan_in, fan_out):
    kw, kb = jax.random.split(key)
    bound = 1.0 / math.sqrt(fan_in)
    w = jax.random.uniform(kw, (fan_in, fan_out), jnp.float32, -bound, bound)
    b = jax.random.uniform(kb, (fan_out,), jnp.float32, -bound, bound)
    return w, b


def _fold_and_pad(scale, shift, w, b, in_pad, out_pad):
    """Fold the preceding eval-mode BN affine into this Linear, then zero-pad."""
    wf = w * scale[:, None]
    bf = shift @ w + b
    fi, fo = wf.shape
    wf = jnp.pad(wf, ((0, in_pad - fi), (0, out_pad - fo)))
    bf = jnp.pad(bf, (0, out_pad - fo))
    return wf.astype(jnp.bfloat16), bf.reshape(1, out_pad).astype(jnp.float32)


def make_params(key, input_dim=512, num_classes=4):
    h1, h2, h3 = input_dim // 4, input_dim // 16, input_dim // 32
    h1p, h2p, h3p = (_round_up(h, _LANE) for h in (h1, h2, h3))
    ncp = _round_up(num_classes, _LANE)

    k1, k2, k3, k4 = jax.random.split(key, 4)
    w1, b1 = _linear_init(k1, input_dim, h1)
    w2, b2 = _linear_init(k2, h1, h2)
    w3, b3 = _linear_init(k3, h2, h3)
    w4, b4 = _linear_init(k4, h3, num_classes)

    s1, t1 = _bn_affine(input_dim)
    s2, t2 = _bn_affine(h1)
    s3, t3 = _bn_affine(h2)
    s4, t4 = _bn_affine(h3)

    w1p, b1p = _fold_and_pad(s1, t1, w1, b1, input_dim, h1p)
    w2p, b2p = _fold_and_pad(s2, t2, w2, b2, h1p, h2p)
    w3p, b3p = _fold_and_pad(s3, t3, w3, b3, h2p, h3p)
    w4p, b4p = _fold_and_pad(s4, t4, w4, b4, h3p, ncp)

    return {
        "num_classes": num_classes,
        "w1": w1p, "b1": b1p,
        "w2": w2p, "b2": b2p,
        "w3": w3p, "b3": b3p,
        "w4": w4p, "b4": b4p,
    }


# --------------------------------- forward -------------------------------------

def _choose_tm(m):
    # Multiples of 16 (bf16 sublane packing). Small batches: one sublane-rounded
    # tile. Larger batches: >= 2 grid steps (keeps both v7x TensorCores busy via
    # the "parallel" grid axis) with tiles as big as possible, capped at 1024
    # rows so the double-buffered working set fits every generation's scoped
    # VMEM default.
    if m <= 32:
        return _round_up(max(m, 1), 16)
    return min(_TM_CAP, _round_up(pl.cdiv(m, 2), 16))


def regression_classifier_forward(x, params):
    m, d = x.shape
    nc = params["num_classes"]
    h1p = params["w1"].shape[1]
    h2p = params["w2"].shape[1]
    h3p = params["w3"].shape[1]
    ncp = params["w4"].shape[1]

    tm = _choose_tm(m)
    mp = _round_up(m, tm)

    xp = x
    if mp != m:
        xp = jnp.pad(xp, ((0, mp - m), (0, 0)))

    fwd = _build_forward(mp, tm, d, h1p, h2p, h3p, ncp)
    out = fwd(xp,
              params["w1"], params["b1"],
              params["w2"], params["b2"],
              params["w3"], params["b3"],
              params["w4"], params["b4"])
    return out[:m, :nc].astype(jnp.float32)


# ----------------------------------- main ---------------------------------------

if __name__ == "__main__":
    input_dim, num_classes, batch = 512, 4, 16
    key = jax.random.PRNGKey(0)
    kx, kp = jax.random.split(key)

    # Producer emits bf16 directly: halves the dominant HBM read vs f32 input.
    x = jax.random.normal(kx, (batch, input_dim), jnp.float32).astype(jnp.bfloat16)
    params = make_params(kp, input_dim=input_dim, num_classes=num_classes)

    y = regression_classifier_forward(x, params)
    y = jax.block_until_ready(y)

    assert y.shape == (batch, num_classes), y.shape
    assert bool(jnp.all(jnp.isfinite(y)))
    assert bool(jnp.all(y >= 0.0))   # final ReLU
    print("KERNEL_OK")
</pallas_src>

<mosaic_0001>
module attributes {stable_mosaic.version = 11 : i64} {
  func.func @_mlp_kernel(%arg0: i32, %arg1: memref<16x512xbf16, #tpu.memory_space<vmem>>, %arg2: memref<512x128xbf16, #tpu.memory_space<vmem>>, %arg3: memref<1x128xf32, #tpu.memory_space<vmem>>, %arg4: memref<128x128xbf16, #tpu.memory_space<vmem>>, %arg5: memref<1x128xf32, #tpu.memory_space<vmem>>, %arg6: memref<128x128xbf16, #tpu.memory_space<vmem>>, %arg7: memref<1x128xf32, #tpu.memory_space<vmem>>, %arg8: memref<128x128xbf16, #tpu.memory_space<vmem>>, %arg9: memref<1x128xf32, #tpu.memory_space<vmem>>, %arg10: memref<16x128xbf16, #tpu.memory_space<vmem>>) attributes {dimension_semantics = [#tpu.dimension_semantics<parallel>], iteration_bounds = array<i64: 1>, scalar_prefetch = 0 : i64, scratch_operands = 0 : i64, tpu.core_type = #tpu.core_type<tc>, window_params = [{transform_indices = @transform_0, window_bounds = array<i64: 16, 512>}, {pipeline_mode = #tpu.pipeline_mode<synchronous>, transform_indices = @transform_1, window_bounds = array<i64: 512, 128>}, {pipeline_mode = #tpu.pipeline_mode<synchronous>, transform_indices = @transform_2, window_bounds = array<i64: 1, 128>}, {pipeline_mode = #tpu.pipeline_mode<synchronous>, transform_indices = @transform_3, window_bounds = array<i64: 128, 128>}, {pipeline_mode = #tpu.pipeline_mode<synchronous>, transform_indices = @transform_4, window_bounds = array<i64: 1, 128>}, {pipeline_mode = #tpu.pipeline_mode<synchronous>, transform_indices = @transform_5, window_bounds = array<i64: 128, 128>}, {pipeline_mode = #tpu.pipeline_mode<synchronous>, transform_indices = @transform_6, window_bounds = array<i64: 1, 128>}, {pipeline_mode = #tpu.pipeline_mode<synchronous>, transform_indices = @transform_7, window_bounds = array<i64: 128, 128>}, {pipeline_mode = #tpu.pipeline_mode<synchronous>, transform_indices = @transform_8, window_bounds = array<i64: 1, 128>}, {transform_indices = @transform_9, window_bounds = array<i64: 16, 128>}]} {
    %c0 = arith.constant 0 : index
    %c0_0 = arith.constant 0 : index
    %0 = vector.load %arg1[%c0, %c0_0] : memref<16x512xbf16, #tpu.memory_space<vmem>>, vector<16x512xbf16>
    %c0_1 = arith.constant 0 : index
    %c0_2 = arith.constant 0 : index
    %1 = vector.load %arg2[%c0_1, %c0_2] : memref<512x128xbf16, #tpu.memory_space<vmem>>, vector<512x128xbf16>
    %cst = arith.constant dense<0.000000e+00> : vector<16x128xf32>
    %2 = tpu.matmul %0, %1, %cst {dimension_numbers = #tpu.dot_dimension_numbers<[1], [0], [0], [1], [0, 0, 1, 1], [], []>} : vector<16x512xbf16>, vector<512x128xbf16>, vector<16x128xf32> -> vector<16x128xf32>
    %c0_3 = arith.constant 0 : index
    %c0_4 = arith.constant 0 : index
    %3 = vector.load %arg3[%c0_3, %c0_4] : memref<1x128xf32, #tpu.memory_space<vmem>>, vector<1x128xf32>
    %4 = vector.broadcast %3 : vector<1x128xf32> to vector<16x128xf32>
    %5 = arith.addf %2, %4 : vector<16x128xf32>
    %cst_5 = arith.constant 0.000000e+00 : f32
    %6 = vector.broadcast %cst_5 : f32 to vector<16x128xf32>
    %7 = arith.maximumf %5, %6 : vector<16x128xf32>
    %8 = arith.truncf %7 : vector<16x128xf32> to vector<16x128xbf16>
    %c0_6 = arith.constant 0 : index
    %c0_7 = arith.constant 0 : index
    %9 = vector.load %arg4[%c0_6, %c0_7] : memref<128x128xbf16, #tpu.memory_space<vmem>>, vector<128x128xbf16>
    %cst_8 = arith.constant dense<0.000000e+00> : vector<16x128xf32>
    %10 = tpu.matmul %8, %9, %cst_8 {dimension_numbers = #tpu.dot_dimension_numbers<[1], [0], [0], [1], [0, 0, 1, 1], [], []>} : vector<16x128xbf16>, vector<128x128xbf16>, vector<16x128xf32> -> vector<16x128xf32>
    %c0_9 = arith.constant 0 : index
    %c0_10 = arith.constant 0 : index
    %11 = vector.load %arg5[%c0_9, %c0_10] : memref<1x128xf32, #tpu.memory_space<vmem>>, vector<1x128xf32>
    %12 = vector.broadcast %11 : vector<1x128xf32> to vector<16x128xf32>
    %13 = arith.addf %10, %12 : vector<16x128xf32>
    %cst_11 = arith.constant 0.000000e+00 : f32
    %14 = vector.broadcast %cst_11 : f32 to vector<16x128xf32>
    %15 = arith.maximumf %13, %14 : vector<16x128xf32>
    %16 = arith.truncf %15 : vector<16x128xf32> to vector<16x128xbf16>
    %c0_12 = arith.constant 0 : index
    %c0_13 = arith.constant 0 : index
    %17 = vector.load %arg6[%c0_12, %c0_13] : memref<128x128xbf16, #tpu.memory_space<vmem>>, vector<128x128xbf16>
    %cst_14 = arith.constant dense<0.000000e+00> : vector<16x128xf32>
    %18 = tpu.matmul %16, %17, %cst_14 {dimension_numbers = #tpu.dot_dimension_numbers<[1], [0], [0], [1], [0, 0, 1, 1], [], []>} : vector<16x128xbf16>, vector<128x128xbf16>, vector<16x128xf32> -> vector<16x128xf32>
    %c0_15 = arith.constant 0 : index
    %c0_16 = arith.constant 0 : index
    %19 = vector.load %arg7[%c0_15, %c0_16] : memref<1x128xf32, #tpu.memory_space<vmem>>, vector<1x128xf32>
    %20 = vector.broadcast %19 : vector<1x128xf32> to vector<16x128xf32>
    %21 = arith.addf %18, %20 : vector<16x128xf32>
    %cst_17 = arith.constant 0.000000e+00 : f32
    %22 = vector.broadcast %cst_17 : f32 to vector<16x128xf32>
    %23 = arith.maximumf %21, %22 : vector<16x128xf32>
    %24 = arith.truncf %23 : vector<16x128xf32> to vector<16x128xbf16>
    %c0_18 = arith.constant 0 : index
    %c0_19 = arith.constant 0 : index
    %25 = vector.load %arg8[%c0_18, %c0_19] : memref<128x128xbf16, #tpu.memory_space<vmem>>, vector<128x128xbf16>
    %cst_20 = arith.constant dense<0.000000e+00> : vector<16x128xf32>
    %26 = tpu.matmul %24, %25, %cst_20 {dimension_numbers = #tpu.dot_dimension_numbers<[1], [0], [0], [1], [0, 0, 1, 1], [], []>} : vector<16x128xbf16>, vector<128x128xbf16>, vector<16x128xf32> -> vector<16x128xf32>
    %c0_21 = arith.constant 0 : index
    %c0_22 = arith.constant 0 : index
    %27 = vector.load %arg9[%c0_21, %c0_22] : memref<1x128xf32, #tpu.memory_space<vmem>>, vector<1x128xf32>
    %28 = vector.broadcast %27 : vector<1x128xf32> to vector<16x128xf32>
    %29 = arith.addf %26, %28 : vector<16x128xf32>
    %cst_23 = arith.constant 0.000000e+00 : f32
    %30 = vector.broadcast %cst_23 : f32 to vector<16x128xf32>
    %31 = arith.maximumf %29, %30 : vector<16x128xf32>
    %32 = arith.truncf %31 : vector<16x128xf32> to vector<16x128xbf16>
    %c0_24 = arith.constant 0 : index
    %c0_25 = arith.constant 0 : index
    %33 = vector.load %arg10[%c0_24, %c0_25] : memref<16x128xbf16, #tpu.memory_space<vmem>>, vector<16x128xbf16>
    tpu.vector_store %arg10[%c0_24, %c0_25], %32 {strides = array<i32>} : memref<16x128xbf16, #tpu.memory_space<vmem>>, vector<16x128xbf16>,
    return
  }
  func.func @transform_0(%arg0: i32) -> (i32, i32) {
    %c0_i32 = arith.constant 0 : i32
    %c0_i32_0 = arith.constant 0 : i32
    return %arg0, %c0_i32 : i32, i32
  }
  func.func @transform_1(%arg0: i32) -> (i32, i32) {
    %c0_i32 = arith.constant 0 : i32
    %c0_i32_0 = arith.constant 0 : i32
    %c0_i32_1 = arith.constant 0 : i32
    return %c0_i32, %c0_i32_0 : i32, i32
  }
  func.func @transform_2(%arg0: i32) -> (i32, i32) {
    %c0_i32 = arith.constant 0 : i32
    %c0_i32_0 = arith.constant 0 : i32
    %c0_i32_1 = arith.constant 0 : i32
    return %c0_i32, %c0_i32_0 : i32, i32
  }
  func.func @transform_3(%arg0: i32) -> (i32, i32) {
    %c0_i32 = arith.constant 0 : i32
    %c0_i32_0 = arith.constant 0 : i32
    %c0_i32_1 = arith.constant 0 : i32
    return %c0_i32, %c0_i32_0 : i32, i32
  }
  func.func @transform_4(%arg0: i32) -> (i32, i32) {
    %c0_i32 = arith.constant 0 : i32
    %c0_i32_0 = arith.constant 0 : i32
    %c0_i32_1 = arith.constant 0 : i32
    return %c0_i32, %c0_i32_0 : i32, i32
  }
  func.func @transform_5(%arg0: i32) -> (i32, i32) {
    %c0_i32 = arith.constant 0 : i32
    %c0_i32_0 = arith.constant 0 : i32
    %c0_i32_1 = arith.constant 0 : i32
    return %c0_i32, %c0_i32_0 : i32, i32
  }
  func.func @transform_6(%arg0: i32) -> (i32, i32) {
    %c0_i32 = arith.constant 0 : i32
    %c0_i32_0 = arith.constant 0 : i32
    %c0_i32_1 = arith.constant 0 : i32
    return %c0_i32, %c0_i32_0 : i32, i32
  }
  func.func @transform_7(%arg0: i32) -> (i32, i32) {
    %c0_i32 = arith.constant 0 : i32
    %c0_i32_0 = arith.constant 0 : i32
    %c0_i32_1 = arith.constant 0 : i32
    return %c0_i32, %c0_i32_0 : i32, i32
  }
  func.func @transform_8(%arg0: i32) -> (i32, i32) {
    %c0_i32 = arith.constant 0 : i32
    %c0_i32_0 = arith.constant 0 : i32
    %c0_i32_1 = arith.constant 0 : i32
    return %c0_i32, %c0_i32_0 : i32, i32
  }
  func.func @transform_9(%arg0: i32) -> (i32, i32) {
    %c0_i32 = arith.constant 0 : i32
    %c0_i32_0 = arith.constant 0 : i32
    return %arg0, %c0_i32 : i32, i32
  }
}

</mosaic_0001>

<llo_original>
// kernel: tpu_custom_call.1
$region0: #{tpu_custom_call.1}
  #allocation0 [shape = 'u32[]', space=smem, size = 0x4, offset = 0x4, fixed_abs, tag = 'smem constant byte address 0x4 - core index']
  #allocation1 [shape = 'u32[144,128]{1,0:T(1,128)}', space=vmem, size = 0x12000, scoped, tag = 'internal scratch']
  %s0 = inlined_call_operand.hbm [shape: bf16[16,512], index: 0, kind: input, shape index: {}]
  %s1 = inlined_call_operand.hbm [shape: bf16[512,128], index: 1, kind: input, shape index: {}]
  %s2 = inlined_call_operand.vmem [shape: f32[1,128], index: 2, kind: input, shape index: {}]
  %s3 = inlined_call_operand.hbm [shape: bf16[128,128], index: 3, kind: input, shape index: {}]
  %s4 = inlined_call_operand.vmem [shape: f32[1,128], index: 4, kind: input, shape index: {}]
  %s5 = inlined_call_operand.hbm [shape: bf16[128,128], index: 5, kind: input, shape index: {}]
  %s6 = inlined_call_operand.vmem [shape: f32[1,128], index: 6, kind: input, shape index: {}]
  %s7 = inlined_call_operand.hbm [shape: bf16[128,128], index: 7, kind: input, shape index: {}]
  %s8 = inlined_call_operand.vmem [shape: f32[1,128], index: 8, kind: input, shape index: {}]
  %s9 = inlined_call_operand.hbm [shape: bf16[16,128], index: 9, kind: output, shape index: {}]
  %s10 = sld [smem:[#allocation0]]
  $region66: #{tpu_custom_call.1} parent=0
    _
  %s12 = ssub.s32 1, %s10
  %s13 = scalar_select 0, %s12, %s10
  $region1: #{tpu_custom_call.1} parent=0
    #allocation2 [shape = 'u8[16384]{0}', space=vmem, size = 0x4000, scoped, tag = 'input window, operand 0, single buffered']
    #allocation3 [shape = 's32[1]{0}', space=sflag, size = 0x4, scoped, tag = 'scoped memory for tpu_custom_call.1']
    #allocation4 [shape = 's32[1]{0}', space=sflag, size = 0x4, scoped, tag = 'scoped memory for tpu_custom_call.1']
    #allocation5 [shape = 'u8[131072]{0}', space=vmem, size = 0x20000, scoped, tag = 'input window, operand 1, single buffered']
    #allocation6 [shape = 's32[1]{0}', space=sflag, size = 0x4, scoped, tag = 'scoped memory for tpu_custom_call.1']
    #allocation7 [shape = 'u8[32768]{0}', space=vmem, size = 0x8000, scoped, tag = 'input window, operand 3, single buffered']
    #allocation8 [shape = 'u8[32768]{0}', space=vmem, size = 0x8000, scoped, tag = 'input window, operand 5, single buffered']
    #allocation9 [shape = 's32[1]{0}', space=sflag, size = 0x4, scoped, tag = 'scoped memory for tpu_custom_call.1']
    #allocation10 [shape = 'u8[32768]{0}', space=vmem, size = 0x8000, scoped, tag = 'input window, operand 7, single buffered']
    #allocation11 [shape = 'u8[4096]{0}', space=vmem, size = 0x1000, scoped, tag = 'output window, operand 0, single buffered']
    %14 = vsyncpa [#allocation3], 0
    %15 = vsyncpa [#allocation6], 0
    %16 = vsyncpa [#allocation9], 0
    %17 = vsyncpa [#allocation4], 0
    // Predicated region
    $region2: #{tpu_custom_call.1} parent=1 // pred_check
      _
    $region3: #{tpu_custom_call.1} parent=1 // pred_check_branch
      %19 = sbr.rel (0) target = $region5
    $region4: #{tpu_custom_call.1} parent=1 // pred_region
      %s21 = ssub.s32 512, 512
      %22 = vsyncadd [#allocation3], %s21
      %s23 = sshll.u32 [#allocation2], 4
      %s24 = int_to_ptr.vmem [resolvable:$true] %s23
      %29 = dma.hbm_to_vmem [thread:$0]  %s0, 512, %s24, [#allocation3], 256, 256, 16
    $region5: #{tpu_custom_call.1} parent=1 // pred_fallthru
      _
    // Predicated region
    $region6: #{tpu_custom_call.1} parent=1 // pred_check
      _
    $region7: #{tpu_custom_call.1} parent=1 // pred_check_branch
      %31 = sbr.rel (0) target = $region9
    $region8: #{tpu_custom_call.1} parent=1 // pred_region
      %s33 = ssub.s32 4096, 4096
      %34 = vsyncadd [#allocation6], %s33
      %s35 = sshll.u32 [#allocation5], 4
      %s36 = int_to_ptr.vmem [resolvable:$true] %s35
      %41 = dma.hbm_to_vmem [thread:$0]  %s1, 4096, %s36, [#allocation6], 64, 64, 4
    $region9: #{tpu_custom_call.1} parent=1 // pred_fallthru
      _
    // Predicated region
    $region10: #{tpu_custom_call.1} parent=1 // pred_check
      _
    $region11: #{tpu_custom_call.1} parent=1 // pred_check_branch
      %43 = sbr.rel (0) target = $region13
    $region12: #{tpu_custom_call.1} parent=1 // pred_region
      _
    $region13: #{tpu_custom_call.1} parent=1 // pred_fallthru
      _
    // Predicated region
    $region14: #{tpu_custom_call.1} parent=1 // pred_check
      _
    $region15: #{tpu_custom_call.1} parent=1 // pred_check_branch
      %45 = sbr.rel (0) target = $region17
    $region16: #{tpu_custom_call.1} parent=1 // pred_region
      %s47 = ssub.s32 1024, 1024
      %48 = vsyncadd [#allocation6], %s47
      %s49 = sshll.u32 [#allocation7], 4
      %s50 = int_to_ptr.vmem [resolvable:$true] %s49
      %55 = dma.hbm_to_vmem [thread:$0]  %s3, 1024, %s50, [#allocation6], 64, 64, 4
    $region17: #{tpu_custom_call.1} parent=1 // pred_fallthru
      _
    // Predicated region
    $region18: #{tpu_custom_call.1} parent=1 // pred_check
      _
    $region19: #{tpu_custom_call.1} parent=1 // pred_check_branch
      %57 = sbr.rel (0) target = $region21
    $region20: #{tpu_custom_call.1} parent=1 // pred_region
      _
    $region21: #{tpu_custom_call.1} parent=1 // pred_fallthru
      _
    // Predicated region
    $region22: #{tpu_custom_call.1} parent=1 // pred_check
      _
    $region23: #{tpu_custom_call.1} parent=1 // pred_check_branch
      %59 = sbr.rel (0) target = $region25
    $region24: #{tpu_custom_call.1} parent=1 // pred_region
      %s61 = ssub.s32 1024, 1024
      %62 = vsyncadd [#allocation9], %s61
      %s63 = sshll.u32 [#allocation8], 4
      %s64 = int_to_ptr.vmem [resolvable:$true] %s63
      %69 = dma.hbm_to_vmem [thread:$0]  %s5, 1024, %s64, [#allocation9], 64, 64, 4
    $region25: #{tpu_custom_call.1} parent=1 // pred_fallthru
      _
    // Predicated region
    $region26: #{tpu_custom_call.1} parent=1 // pred_check
      _
    $region27: #{tpu_custom_call.1} parent=1 // pred_check_branch
      %71 = sbr.rel (0) target = $region29
    $region28: #{tpu_custom_call.1} parent=1 // pred_region
      _
    $region29: #{tpu_custom_call.1} parent=1 // pred_fallthru
      _
    // Predicated region
    $region30: #{tpu_custom_call.1} parent=1 // pred_check
      _
    $region31: #{tpu_custom_call.1} parent=1 // pred_check_branch
      %73 = sbr.rel (0) target = $region33
    $region32: #{tpu_custom_call.1} parent=1 // pred_region
      %s75 = ssub.s32 1024, 1024
      %76 = vsyncadd [#allocation9], %s75
      %s77 = sshll.u32 [#allocation10], 4
      %s78 = int_to_ptr.vmem [resolvable:$true] %s77
      %83 = dma.hbm_to_vmem [thread:$0]  %s7, 1024, %s78, [#allocation9], 64, 64, 4
    $region33: #{tpu_custom_call.1} parent=1 // pred_fallthru
      _
    // Predicated region
    $region34: #{tpu_custom_call.1} parent=1 // pred_check
      _
    $region35: #{tpu_custom_call.1} parent=1 // pred_check_branch
      %85 = sbr.rel (0) target = $region37
    $region36: #{tpu_custom_call.1} parent=1 // pred_region
      _
    $region37: #{tpu_custom_call.1} parent=1 // pred_fallthru
      _
    // Predicated region
    $region38: #{tpu_custom_call.1} parent=1 // pred_check
      _
    $region39: #{tpu_custom_call.1} parent=1 // pred_check_branch
      %87 = sbr.rel (0) target = $region41
    $region40: #{tpu_custom_call.1} parent=1 // pred_region
      %88 = dma.done [#allocation3], 512
    $region41: #{tpu_custom_call.1} parent=1 // pred_fallthru
      _
    // Predicated region
    $region42: #{tpu_custom_call.1} parent=1 // pred_check
      _
    $region43: #{tpu_custom_call.1} parent=1 // pred_check_branch
      %90 = sbr.rel (0) target = $region45
    $region44: #{tpu_custom_call.1} parent=1 // pred_region
      %91 = dma.done [#allocation6], 4096
    $region45: #{tpu_custom_call.1} parent=1 // pred_fallthru
      _
    // Predicated region
    $region46: #{tpu_custom_call.1} parent=1 // pred_check
      _
    $region47: #{tpu_custom_call.1} parent=1 // pred_check_branch
      %93 = sbr.rel (0) target = $region49
    $region48: #{tpu_custom_call.1} parent=1 // pred_region
      %94 = dma.done [#allocation6], 1024
    $region49: #{tpu_custom_call.1} parent=1 // pred_fallthru
      _
    // Predicated region
    $region50: #{tpu_custom_call.1} parent=1 // pred_check
      _
    $region51: #{tpu_custom_call.1} parent=1 // pred_check_branch
      %96 = sbr.rel (0) target = $region53
    $region52: #{tpu_custom_call.1} parent=1 // pred_region
      %97 = dma.done [#allocation9], 1024
    $region53: #{tpu_custom_call.1} parent=1 // pred_fallthru
      _
    // Predicated region
    $region54: #{tpu_custom_call.1} parent=1 // pred_check
      _
    $region55: #{tpu_custom_call.1} parent=1 // pred_check_branch
      %99 = sbr.rel (0) target = $region57
    $region56: #{tpu_custom_call.1} parent=1 // pred_region
      %100 = dma.done [#allocation9], 1024
    $region57: #{tpu_custom_call.1} parent=1 // pred_fallthru
      _
    %v102 = vld [vmem:[#allocation2] sm:$0xff]
    %v103 = vld [vmem:[#allocation2 + $0x8] sm:$0xff]
    %v104 = vld [vmem:[#allocation2 + $0x10] sm:$0xff]
    %v105 = vld [vmem:[#allocation2 + $0x18] sm:$0xff]
    %v106 = vld [vmem:[#allocation5] sm:$0xf]
    %v107 = vld [vmem:[#allocation5 + $0x4] sm:$0xf]
    %v108 = vld [vmem:[#allocation5 + $0x8] sm:$0xf]
    %v109 = vld [vmem:[#allocation5 + $0xc] sm:$0xf]
    %v110 = vld [vmem:[#allocation5 + $0x10] sm:$0xf]
    %v111 = vld [vmem:[#allocation5 + $0x14] sm:$0xf]
    %v112 = vld [vmem:[#allocation5 + $0x18] sm:$0xf]
    %v113 = vld [vmem:[#allocation5 + $0x1c] sm:$0xf]
    %v114 = vld [vmem:[#allocation5 + $0x20] sm:$0xf]
    %v115 = vld [vmem:[#allocation5 + $0x24] sm:$0xf]
    %v116 = vld [vmem:[#allocation5 + $0x28] sm:$0xf]
    %v117 = vld [vmem:[#allocation5 + $0x2c] sm:$0xf]
    %v118 = vld [vmem:[#allocation5 + $0x30] sm:$0xf]
    %v119 = vld [vmem:[#allocation5 + $0x34] sm:$0xf]
    %v120 = vld [vmem:[#allocation5 + $0x38] sm:$0xf]
    %v121 = vld [vmem:[#allocation5 + $0x3c] sm:$0xf]
    %v122 = vld [vmem:[#allocation5 + $0x40] sm:$0xf]
    %v123 = vld [vmem:[#allocation5 + $0x44] sm:$0xf]
    %v124 = vld [vmem:[#allocation5 + $0x48] sm:$0xf]
    %v125 = vld [vmem:[#allocation5 + $0x4c] sm:$0xf]
    %v126 = vld [vmem:[#allocation5 + $0x50] sm:$0xf]
    %v127 = vld [vmem:[#allocation5 + $0x54] sm:$0xf]
    %v128 = vld [vmem:[#allocation5 + $0x58] sm:$0xf]
    %v129 = vld [vmem:[#allocation5 + $0x5c] sm:$0xf]
    %v130 = vld [vmem:[#allocation5 + $0x60] sm:$0xf]
    %v131 = vld [vmem:[#allocation5 + $0x64] sm:$0xf]
    %v132 = vld [vmem:[#allocation5 + $0x68] sm:$0xf]
    %v133 = vld [vmem:[#allocation5 + $0x6c] sm:$0xf]
    %v134 = vld [vmem:[#allocation5 + $0x70] sm:$0xf]
    %v135 = vld [vmem:[#allocation5 + $0x74] sm:$0xf]
    %v136 = vld [vmem:[#allocation5 + $0x78] sm:$0xf]
    %v137 = vld [vmem:[#allocation5 + $0x7c] sm:$0xf]
    %v138 = vld [vmem:[#allocation5 + $0x80] sm:$0xf]
    %v139 = vld [vmem:[#allocation5 + $0x84] sm:$0xf]
    %v140 = vld [vmem:[#allocation5 + $0x88] sm:$0xf]
    %v141 = vld [vmem:[#allocation5 + $0x8c] sm:$0xf]
    %v142 = vld [vmem:[#allocation5 + $0x90] sm:$0xf]
    %v143 = vld [vmem:[#allocation5 + $0x94] sm:$0xf]
    %v144 = vld [vmem:[#allocation5 + $0x98] sm:$0xf]
    %v145 = vld [vmem:[#allocation5 + $0x9c] sm:$0xf]
    %v146 = vld [vmem:[#allocation5 + $0xa0] sm:$0xf]
    %v147 = vld [vmem:[#allocation5 + $0xa4] sm:$0xf]
    %v148 = vld [vmem:[#allocation5 + $0xa8] sm:$0xf]
    %v149 = vld [vmem:[#allocation5 + $0xac] sm:$0xf]
    %v150 = vld [vmem:[#allocation5 + $0xb0] sm:$0xf]
    %v151 = vld [vmem:[#allocation5 + $0xb4] sm:$0xf]
    %v152 = vld [vmem:[#allocation5 + $0xb8] sm:$0xf]
    %v153 = vld [vmem:[#allocation5 + $0xbc] sm:$0xf]
    %v154 = vld [vmem:[#allocation5 + $0xc0] sm:$0xf]
    %v155 = vld [vmem:[#allocation5 + $0xc4] sm:$0xf]
    %v156 = vld [vmem:[#allocation5 + $0xc8] sm:$0xf]
    %v157 = vld [vmem:[#allocation5 + $0xcc] sm:$0xf]
    %v158 = vld [vmem:[#allocation5 + $0xd0] sm:$0xf]
    %v159 = vld [vmem:[#allocation5 + $0xd4] sm:$0xf]
    %v160 = vld [vmem:[#allocation5 + $0xd8] sm:$0xf]
    %v161 = vld [vmem:[#allocation5 + $0xdc] sm:$0xf]
    %v162 = vld [vmem:[#allocation5 + $0xe0] sm:$0xf]
    %v163 = vld [vmem:[#allocation5 + $0xe4] sm:$0xf]
    %v164 = vld [vmem:[#allocation5 + $0xe8] sm:$0xf]
    %v165 = vld [vmem:[#allocation5 + $0xec] sm:$0xf]
    %v166 = vld [vmem:[#allocation5 + $0xf0] sm:$0xf]
    %v167 = vld [vmem:[#allocation5 + $0xf4] sm:$0xf]
    %v168 = vld [vmem:[#allocation5 + $0xf8] sm:$0xf]
    %v169 = vld [vmem:[#allocation5 + $0xfc] sm:$0xf]
    %v170 = vld [vmem:[%s2] sm:$0x1]
    %v172 = vlaneseq
    %v173 = vshrl.u32 %v172, 7
    %v174 = vsub.s32 0, %v173
    %v175 = vrot.slane %v170, %v174
    %v181 = vunpack.c.l.b16 %v102
    %v182 = vunpack.c.h.b16 %v102
    %v183 = vunpack.c.l.b16 %v103
    %v184 = vunpack.c.h.b16 %v103
    %v185 = vunpack.c.l.b16 %v104
    %v186 = vunpack.c.h.b16 %v104
    %v187 = vunpack.c.l.b16 %v105
    %v188 = vunpack.c.h.b16 %v105
    %v189 = vpack.c.b16 %v185, %v181
    %v190 = vpack.c.b16 %v186, %v182
    %v191 = vpack.c.b16 %v187, %v183
    %v192 = vpack.c.b16 %v188, %v184
    %v261 = vunpack.c.l.b16 %v106
    %v262 = vunpack.c.l.b16 %v107
    %v263 = vunpack.c.l.b16 %v108
    %v264 = vunpack.c.l.b16 %v109
    %v265 = vunpack.c.l.b16 %v110
    %v266 = vunpack.c.l.b16 %v111
    %v267 = vunpack.c.l.b16 %v112
    %v268 = vunpack.c.l.b16 %v113
    %v269 = vunpack.c.l.b16 %v114
    %v270 = vunpack.c.l.b16 %v115
    %v271 = vunpack.c.l.b16 %v116
    %v272 = vunpack.c.l.b16 %v117
    %v273 = vunpack.c.l.b16 %v118
    %v274 = vunpack.c.l.b16 %v119
    %v275 = vunpack.c.l.b16 %v120
    %v276 = vunpack.c.l.b16 %v121
    %v277 = vunpack.c.l.b16 %v122
    %v278 = vunpack.c.l.b16 %v123
    %v279 = vunpack.c.l.b16 %v124
    %v280 = vunpack.c.l.b16 %v125
    %v281 = vunpack.c.l.b16 %v126
    %v282 = vunpack.c.l.b16 %v127
    %v283 = vunpack.c.l.b16 %v128
    %v284 = vunpack.c.l.b16 %v129
    %v285 = vunpack.c.l.b16 %v130
    %v286 = vunpack.c.l.b16 %v131
    %v287 = vunpack.c.l.b16 %v132
    %v288 = vunpack.c.l.b16 %v133
    %v289 = vunpack.c.l.b16 %v134
    %v290 = vunpack.c.l.b16 %v135
    %v291 = vunpack.c.l.b16 %v136
    %v292 = vunpack.c.l.b16 %v137
    %v293 = vunpack.c.l.b16 %v138
    %v294 = vunpack.c.l.b16 %v139
    %v295 = vunpack.c.l.b16 %v140
    %v296 = vunpack.c.l.b16 %v141
    %v297 = vunpack.c.l.b16 %v142
    %v298 = vunpack.c.l.b16 %v143
    %v299 = vunpack.c.l.b16 %v144
    %v300 = vunpack.c.l.b16 %v145
    %v301 = vunpack.c.l.b16 %v146
    %v302 = vunpack.c.l.b16 %v147
    %v303 = vunpack.c.l.b16 %v148
    %v304 = vunpack.c.l.b16 %v149
    %v305 = vunpack.c.l.b16 %v150
    %v306 = vunpack.c.l.b16 %v151
    %v307 = vunpack.c.l.b16 %v152
    %v308 = vunpack.c.l.b16 %v153
    %v309 = vunpack.c.l.b16 %v154
    %v310 = vunpack.c.l.b16 %v155
    %v311 = vunpack.c.l.b16 %v156
    %v312 = vunpack.c.l.b16 %v157
    %v313 = vunpack.c.l.b16 %v158
    %v314 = vunpack.c.l.b16 %v159
    %v315 = vunpack.c.l.b16 %v160
    %v316 = vunpack.c.l.b16 %v161
    %v317 = vunpack.c.l.b16 %v162
    %v318 = vunpack.c.l.b16 %v163
    %v319 = vunpack.c.l.b16 %v164
    %v320 = vunpack.c.l.b16 %v165
    %v321 = vunpack.c.l.b16 %v166
    %v322 = vunpack.c.l.b16 %v167
    %v323 = vunpack.c.l.b16 %v168
    %v324 = vunpack.c.l.b16 %v169
    %v325 = vpack.c.b16 %v262, %v261
    %v326 = vpack.c.b16 %v264, %v263
    %v327 = vpack.c.b16 %v266, %v265
    %v328 = vpack.c.b16 %v268, %v267
    %v329 = vpack.c.b16 %v270, %v269
    %v330 = vpack.c.b16 %v272, %v271
    %v331 = vpack.c.b16 %v274, %v273
    %v332 = vpack.c.b16 %v276, %v275
    %v333 = vpack.c.b16 %v278, %v277
    %v334 = vpack.c.b16 %v280, %v279
    %v335 = vpack.c.b16 %v282, %v281
    %v336 = vpack.c.b16 %v284, %v283
    %v337 = vpack.c.b16 %v286, %v285
    %v338 = vpack.c.b16 %v288, %v287
    %v339 = vpack.c.b16 %v290, %v289
    %v340 = vpack.c.b16 %v292, %v291
    %v341 = vpack.c.b16 %v294, %v293
    %v342 = vpack.c.b16 %v296, %v295
    %v343 = vpack.c.b16 %v298, %v297
    %v344 = vpack.c.b16 %v300, %v299
    %v345 = vpack.c.b16 %v302, %v301
    %v346 = vpack.c.b16 %v304, %v303
    %v347 = vpack.c.b16 %v306, %v305
    %v348 = vpack.c.b16 %v308, %v307
    %v349 = vpack.c.b16 %v310, %v309
    %v350 = vpack.c.b16 %v312, %v311
    %v351 = vpack.c.b16 %v314, %v313
    %v352 = vpack.c.b16 %v316, %v315
    %v353 = vpack.c.b16 %v318, %v317
    %v354 = vpack.c.b16 %v320, %v319
    %v355 = vpack.c.b16 %v322, %v321
    %v356 = vpack.c.b16 %v324, %v323
    %389 = vmatprep.subr.bf16.mxu0 0
    %390 = vmatpush1.bf16.msra.mxu0 %v332
    %391 = vmatprep.subr.bf16.mxu0 0
    %392 = vmatpush1.bf16.msra.mxu0 %v331
    %393 = vmatprep.subr.bf16.mxu0 0
    %394 = vmatpush1.bf16.msra.mxu0 %v330
    %395 = vmatprep.subr.bf16.mxu0 0
    %396 = vmatpush1.bf16.msra.mxu0 %v329
    %397 = vmatprep.subr.bf16.mxu0 0
    %398 = vmatpush1.bf16.msra.mxu0 %v328
    %399 = vmatprep.subr.bf16.mxu0 0
    %400 = vmatpush1.bf16.msra.mxu0 %v327
    %401 = vmatprep.subr.bf16.mxu0 0
    %402 = vmatpush1.bf16.msra.mxu0 %v326
    %403 = vmatprep.subr.bf16.mxu0 0
    %404 = vmatpush1.bf16.msra.mxu0 %v325
    %405 = vmatprep.subr.bf16.mxu0 0
    %406 = vmatpush2.bf16.msra.mxu0 %v340
    %407 = vmatprep.subr.bf16.mxu0 0
    %408 = vmatpush2.bf16.msra.mxu0 %v339
    %409 = vmatprep.subr.bf16.mxu0 0
    %410 = vmatpush2.bf16.msra.mxu0 %v338
    %411 = vmatprep.subr.bf16.mxu0 0
    %412 = vmatpush2.bf16.msra.mxu0 %v337
    %413 = vmatprep.subr.bf16.mxu0 0
    %414 = vmatpush2.bf16.msra.mxu0 %v336
    %415 = vmatprep.subr.bf16.mxu0 0
    %416 = vmatpush2.bf16.msra.mxu0 %v335
    %417 = vmatprep.subr.bf16.mxu0 0
    %418 = vmatpush2.bf16.msra.mxu0 %v334
    %419 = vmatprep.subr.bf16.mxu0 0
    %420 = vmatpush2.bf16.msra.mxu0 %v333
    %421 = vmatprep.mubr.bf16.mxu0 %v190
    %422 = vmatmul.mubr.bf16.gmra.mxu0 %v189
    %v423 = vpop.f32.mrf.mxu0
    %v424 = vadd.f32 %v175, %v423
    %v425 = vpop.f32.mrf.mxu0
    %v426 = vpop.f32.mrf.mxu0
    %v427 = vadd.f32 %v175, %v426
    %v428 = vpop.f32.mrf.mxu0
    %429 = vdwg.mxu0
    %430 = vmatprep.subr.bf16.mxu0 0
    %431 = vmatpush1.bf16.msra.mxu0 %v348
    %432 = vmatprep.subr.bf16.mxu0 0
    %433 = vmatpush1.bf16.msra.mxu0 %v347
    %434 = vmatprep.subr.bf16.mxu0 0
    %435 = vmatpush1.bf16.msra.mxu0 %v346
    %436 = vmatprep.subr.bf16.mxu0 0
    %437 = vmatpush1.bf16.msra.mxu0 %v345
    %438 = vmatprep.subr.bf16.mxu0 0
    %439 = vmatpush1.bf16.msra.mxu0 %v344
    %440 = vmatprep.subr.bf16.mxu0 0
    %441 = vmatpush1.bf16.msra.mxu0 %v343
    %442 = vmatprep.subr.bf16.mxu0 0
    %443 = vmatpush1.bf16.msra.mxu0 %v342
    %444 = vmatprep.subr.bf16.mxu0 0
    %445 = vmatpush1.bf16.msra.mxu0 %v341
    %446 = vmatprep.subr.bf16.mxu0 0
    %447 = vmatpush2.bf16.msra.mxu0 %v356
    %448 = vmatprep.subr.bf16.mxu0 0
    %449 = vmatpush2.bf16.msra.mxu0 %v355
    %450 = vmatprep.subr.bf16.mxu0 0
    %451 = vmatpush2.bf16.msra.mxu0 %v354
    %452 = vmatprep.subr.bf16.mxu0 0
    %453 = vmatpush2.bf16.msra.mxu0 %v353
    %454 = vmatprep.subr.bf16.mxu0 0
    %455 = vmatpush2.bf16.msra.mxu0 %v352
    %456 = vmatprep.subr.bf16.mxu0 0
    %457 = vmatpush2.bf16.msra.mxu0 %v351
    %458 = vmatprep.subr.bf16.mxu0 0
    %459 = vmatpush2.bf16.msra.mxu0 %v350
    %460 = vmatprep.subr.bf16.mxu0 0
    %461 = vmatpush2.bf16.msra.mxu0 %v349
    %462 = vmatprep.mubr.bf16.mxu0 %v192
    %463 = vmatmul.mubr.bf16.gmra.mxu0 %v191
    %v464 = vpop.f32.mrf.mxu0
    %v465 = vadd.f32 %v424, %v464
    %v466 = vpop.f32.mrf.mxu0
    %v467 = vpop.f32.mrf.mxu0
    %v468 = vadd.f32 %v427, %v467
    %v469 = vpop.f32.mrf.mxu0
    %470 = vdwg.mxu0
    %v471 = vmax.f32 %v465, 0.0
    %v472 = vmax.f32 %v468, 0.0
    %v473 = vpack.c.bf16 %v472, %v471
    %v474 = vld [vmem:[#allocation7] sm:$0xf]
    %v475 = vld [vmem:[#allocation7 + $0x4] sm:$0xf]
    %v476 = vld [vmem:[#allocation7 + $0x8] sm:$0xf]
    %v477 = vld [vmem:[#allocation7 + $0xc] sm:$0xf]
    %v478 = vld [vmem:[#allocation7 + $0x10] sm:$0xf]
    %v479 = vld [vmem:[#allocation7 + $0x14] sm:$0xf]
    %v480 = vld [vmem:[#allocation7 + $0x18] sm:$0xf]
    %v481 = vld [vmem:[#allocation7 + $0x1c] sm:$0xf]
    %v482 = vld [vmem:[#allocation7 + $0x20] sm:$0xf]
    %v483 = vld [vmem:[#allocation7 + $0x24] sm:$0xf]
    %v484 = vld [vmem:[#allocation7 + $0x28] sm:$0xf]
    %v485 = vld [vmem:[#allocation7 + $0x2c] sm:$0xf]
    %v486 = vld [vmem:[#allocation7 + $0x30] sm:$0xf]
    %v487 = vld [vmem:[#allocation7 + $0x34] sm:$0xf]
    %v488 = vld [vmem:[#allocation7 + $0x38] sm:$0xf]
    %v489 = vld [vmem:[#allocation7 + $0x3c] sm:$0xf]
    %v490 = vld [vmem:[%s4] sm:$0x1]
    %v492 = vlaneseq
    %v493 = vshrl.u32 %v492, 7
    %v494 = vsub.s32 0, %v493
    %v495 = vrot.slane %v490, %v494
    %v513 = vunpack.c.l.b16 %v474
    %v514 = vunpack.c.l.b16 %v475
    %v515 = vunpack.c.l.b16 %v476
    %v516 = vunpack.c.l.b16 %v477
    %v517 = vunpack.c.l.b16 %v478
    %v518 = vunpack.c.l.b16 %v479
    %v519 = vunpack.c.l.b16 %v480
    %v520 = vunpack.c.l.b16 %v481
    %v521 = vunpack.c.l.b16 %v482
    %v522 = vunpack.c.l.b16 %v483
    %v523 = vunpack.c.l.b16 %v484
    %v524 = vunpack.c.l.b16 %v485
    %v525 = vunpack.c.l.b16 %v486
    %v526 = vunpack.c.l.b16 %v487
    %v527 = vunpack.c.l.b16 %v488
    %v528 = vunpack.c.l.b16 %v489
    %v529 = vpack.c.b16 %v514, %v513
    %v530 = vpack.c.b16 %v516, %v515
    %v531 = vpack.c.b16 %v518, %v517
    %v532 = vpack.c.b16 %v520, %v519
    %v533 = vpack.c.b16 %v522, %v521
    %v534 = vpack.c.b16 %v524, %v523
    %v535 = vpack.c.b16 %v526, %v525
    %v536 = vpack.c.b16 %v528, %v527
    %545 = vmatprep.subr.bf16.mxu0 0
    %546 = vmatpush1.bf16.msra.mxu0 %v536
    %547 = vmatprep.subr.bf16.mxu0 0
    %548 = vmatpush1.bf16.msra.mxu0 %v535
    %549 = vmatprep.subr.bf16.mxu0 0
    %550 = vmatpush1.bf16.msra.mxu0 %v534
    %551 = vmatprep.subr.bf16.mxu0 0
    %552 = vmatpush1.bf16.msra.mxu0 %v533
    %553 = vmatprep.subr.bf16.mxu0 0
    %554 = vmatpush1.bf16.msra.mxu0 %v532
    %555 = vmatprep.subr.bf16.mxu0 0
    %556 = vmatpush1.bf16.msra.mxu0 %v531
    %557 = vmatprep.subr.bf16.mxu0 0
    %558 = vmatpush1.bf16.msra.mxu0 %v530
    %559 = vmatprep.subr.bf16.mxu0 0
    %560 = vmatpush1.bf16.msra.mxu0 %v529
    %561 = vmatprep.subr.bf16.mxu0 0
    %562 = vmatpush2.bf16.msra.mxu0 0
    %563 = vmatprep.subr.bf16.mxu0 0
    %564 = vmatpush2.bf16.msra.mxu0 0
    %565 = vmatprep.subr.bf16.mxu0 0
    %566 = vmatpush2.bf16.msra.mxu0 0
    %567 = vmatprep.subr.bf16.mxu0 0
    %568 = vmatpush2.bf16.msra.mxu0 0
    %569 = vmatprep.subr.bf16.mxu0 0
    %570 = vmatpush2.bf16.msra.mxu0 0
    %571 = vmatprep.subr.bf16.mxu0 0
    %572 = vmatpush2.bf16.msra.mxu0 0
    %573 = vmatprep.subr.bf16.mxu0 0
    %574 = vmatpush2.bf16.msra.mxu0 0
    %575 = vmatprep.subr.bf16.mxu0 0
    %576 = vmatpush2.bf16.msra.mxu0 0
    %577 = vmatprep.mubr.bf16.mxu0 0
    %578 = vmatmul.mubr.bf16.gmra.mxu0 %v473
    %v579 = vpop.f32.mrf.mxu0
    %v580 = vadd.f32 %v495, %v579
    %v581 = vpop.f32.mrf.mxu0
    %v582 = vpop.f32.mrf.mxu0
    %v583 = vadd.f32 %v495, %v582
    %v584 = vpop.f32.mrf.mxu0
    %585 = vdwg.mxu0
    %v586 = vmax.f32 %v580, 0.0
    %v587 = vmax.f32 %v583, 0.0
    %v588 = vpack.c.bf16 %v587, %v586
    %v589 = vld [vmem:[#allocation8] sm:$0xf]
    %v590 = vld [vmem:[#allocation8 + $0x4] sm:$0xf]
    %v591 = vld [vmem:[#allocation8 + $0x8] sm:$0xf]
    %v592 = vld [vmem:[#allocation8 + $0xc] sm:$0xf]
    %v593 = vld [vmem:[#allocation8 + $0x10] sm:$0xf]
    %v594 = vld [vmem:[#allocation8 + $0x14] sm:$0xf]
    %v595 = vld [vmem:[#allocation8 + $0x18] sm:$0xf]
    %v596 = vld [vmem:[#allocation8 + $0x1c] sm:$0xf]
    %v597 = vld [vmem:[#allocation8 + $0x20] sm:$0xf]
    %v598 = vld [vmem:[#allocation8 + $0x24] sm:$0xf]
    %v599 = vld [vmem:[#allocation8 + $0x28] sm:$0xf]
    %v600 = vld [vmem:[#allocation8 + $0x2c] sm:$0xf]
    %v601 = vld [vmem:[#allocation8 + $0x30] sm:$0xf]
    %v602 = vld [vmem:[#allocation8 + $0x34] sm:$0xf]
    %v603 = vld [vmem:[#allocation8 + $0x38] sm:$0xf]
    %v604 = vld [vmem:[#allocation8 + $0x3c] sm:$0xf]
    %v605 = vld [vmem:[%s6] sm:$0x1]
    %v607 = vlaneseq
    %v608 = vshrl.u32 %v607, 7
    %v609 = vsub.s32 0, %v608
    %v610 = vrot.slane %v605, %v609
    %v628 = vunpack.c.l.b16 %v589
    %v629 = vunpack.c.l.b16 %v590
    %v630 = vunpack.c.l.b16 %v591
    %v631 = vunpack.c.l.b16 %v592
    %v632 = vunpack.c.l.b16 %v593
    %v633 = vunpack.c.l.b16 %v594
    %v634 = vunpack.c.l.b16 %v595
    %v635 = vunpack.c.l.b16 %v596
    %v636 = vunpack.c.l.b16 %v597
    %v637 = vunpack.c.l.b16 %v598
    %v638 = vunpack.c.l.b16 %v599
    %v639 = vunpack.c.l.b16 %v600
    %v640 = vunpack.c.l.b16 %v601
    %v641 = vunpack.c.l.b16 %v602
    %v642 = vunpack.c.l.b16 %v603
    %v643 = vunpack.c.l.b16 %v604
    %v644 = vpack.c.b16 %v629, %v628
    %v645 = vpack.c.b16 %v631, %v630
    %v646 = vpack.c.b16 %v633, %v632
    %v647 = vpack.c.b16 %v635, %v634
    %v648 = vpack.c.b16 %v637, %v636
    %v649 = vpack.c.b16 %v639, %v638
    %v650 = vpack.c.b16 %v641, %v640
    %v651 = vpack.c.b16 %v643, %v642
    %660 = vmatprep.subr.bf16.mxu0 0
    %661 = vmatpush1.bf16.msra.mxu0 %v651
    %662 = vmatprep.subr.bf16.mxu0 0
    %663 = vmatpush1.bf16.msra.mxu0 %v650
    %664 = vmatprep.subr.bf16.mxu0 0
    %665 = vmatpush1.bf16.msra.mxu0 %v649
    %666 = vmatprep.subr.bf16.mxu0 0
    %667 = vmatpush1.bf16.msra.mxu0 %v648
    %668 = vmatprep.subr.bf16.mxu0 0
    %669 = vmatpush1.bf16.msra.mxu0 %v647
    %670 = vmatprep.subr.bf16.mxu0 0
    %671 = vmatpush1.bf16.msra.mxu0 %v646
    %672 = vmatprep.subr.bf16.mxu0 0
    %673 = vmatpush1.bf16.msra.mxu0 %v645
    %674 = vmatprep.subr.bf16.mxu0 0
    %675 = vmatpush1.bf16.msra.mxu0 %v644
    %676 = vmatprep.subr.bf16.mxu0 0
    %677 = vmatpush2.bf16.msra.mxu0 0
    %678 = vmatprep.subr.bf16.mxu0 0
    %679 = vmatpush2.bf16.msra.mxu0 0
    %680 = vmatprep.subr.bf16.mxu0 0
    %681 = vmatpush2.bf16.msra.mxu0 0
    %682 = vmatprep.subr.bf16.mxu0 0
    %683 = vmatpush2.bf16.msra.mxu0 0
    %684 = vmatprep.subr.bf16.mxu0 0
    %685 = vmatpush2.bf16.msra.mxu0 0
    %686 = vmatprep.subr.bf16.mxu0 0
    %687 = vmatpush2.bf16.msra.mxu0 0
    %688 = vmatprep.subr.bf16.mxu0 0
    %689 = vmatpush2.bf16.msra.mxu0 0
    %690 = vmatprep.subr.bf16.mxu0 0
    %691 = vmatpush2.bf16.msra.mxu0 0
    %692 = vmatprep.mubr.bf16.mxu0 0
    %693 = vmatmul.mubr.bf16.gmra.mxu0 %v588
    %v694 = vpop.f32.mrf.mxu0
    %v695 = vadd.f32 %v610, %v694
    %v696 = vpop.f32.mrf.mxu0
    %v697 = vpop.f32.mrf.mxu0
    %v698 = vadd.f32 %v610, %v697
    %v699 = vpop.f32.mrf.mxu0
    %700 = vdwg.mxu0
    %v701 = vmax.f32 %v695, 0.0
    %v702 = vmax.f32 %v698, 0.0
    %v703 = vpack.c.bf16 %v702, %v701
    %v704 = vld [vmem:[#allocation10] sm:$0xf]
    %v705 = vld [vmem:[#allocation10 + $0x4] sm:$0xf]
    %v706 = vld [vmem:[#allocation10 + $0x8] sm:$0xf]
    %v707 = vld [vmem:[#allocation10 + $0xc] sm:$0xf]
    %v708 = vld [vmem:[#allocation10 + $0x10] sm:$0xf]
    %v709 = vld [vmem:[#allocation10 + $0x14] sm:$0xf]
    %v710 = vld [vmem:[#allocation10 + $0x18] sm:$0xf]
    %v711 = vld [vmem:[#allocation10 + $0x1c] sm:$0xf]
    %v712 = vld [vmem:[#allocation10 + $0x20] sm:$0xf]
    %v713 = vld [vmem:[#allocation10 + $0x24] sm:$0xf]
    %v714 = vld [vmem:[#allocation10 + $0x28] sm:$0xf]
    %v715 = vld [vmem:[#allocation10 + $0x2c] sm:$0xf]
    %v716 = vld [vmem:[#allocation10 + $0x30] sm:$0xf]
    %v717 = vld [vmem:[#allocation10 + $0x34] sm:$0xf]
    %v718 = vld [vmem:[#allocation10 + $0x38] sm:$0xf]
    %v719 = vld [vmem:[#allocation10 + $0x3c] sm:$0xf]
    %v720 = vld [vmem:[%s8] sm:$0x1]
    %v722 = vlaneseq
    %v723 = vshrl.u32 %v722, 7
    %v724 = vsub.s32 0, %v723
    %v725 = vrot.slane %v720, %v724
    %v743 = vunpack.c.l.b16 %v704
    %v744 = vunpack.c.l.b16 %v705
    %v745 = vunpack.c.l.b16 %v706
    %v746 = vunpack.c.l.b16 %v707
    %v747 = vunpack.c.l.b16 %v708
    %v748 = vunpack.c.l.b16 %v709
    %v749 = vunpack.c.l.b16 %v710
    %v750 = vunpack.c.l.b16 %v711
    %v751 = vunpack.c.l.b16 %v712
    %v752 = vunpack.c.l.b16 %v713
    %v753 = vunpack.c.l.b16 %v714
    %v754 = vunpack.c.l.b16 %v715
    %v755 = vunpack.c.l.b16 %v716
    %v756 = vunpack.c.l.b16 %v717
    %v757 = vunpack.c.l.b16 %v718
    %v758 = vunpack.c.l.b16 %v719
    %v759 = vpack.c.b16 %v744, %v743
    %v760 = vpack.c.b16 %v746, %v745
    %v761 = vpack.c.b16 %v748, %v747
    %v762 = vpack.c.b16 %v750, %v749
    %v763 = vpack.c.b16 %v752, %v751
    %v764 = vpack.c.b16 %v754, %v753
    %v765 = vpack.c.b16 %v756, %v755
    %v766 = vpack.c.b16 %v758, %v757
    %775 = vmatprep.subr.bf16.mxu0 0
    %776 = vmatpush1.bf16.msra.mxu0 %v766
    %777 = vmatprep.subr.bf16.mxu0 0
    %778 = vmatpush1.bf16.msra.mxu0 %v765
    %779 = vmatprep.subr.bf16.mxu0 0
    %780 = vmatpush1.bf16.msra.mxu0 %v764
    %781 = vmatprep.subr.bf16.mxu0 0
    %782 = vmatpush1.bf16.msra.mxu0 %v763
    %783 = vmatprep.subr.bf16.mxu0 0
    %784 = vmatpush1.bf16.msra.mxu0 %v762
    %785 = vmatprep.subr.bf16.mxu0 0
    %786 = vmatpush1.bf16.msra.mxu0 %v761
    %787 = vmatprep.subr.bf16.mxu0 0
    %788 = vmatpush1.bf16.msra.mxu0 %v760
    %789 = vmatprep.subr.bf16.mxu0 0
    %790 = vmatpush1.bf16.msra.mxu0 %v759
    %791 = vmatprep.subr.bf16.mxu0 0
    %792 = vmatpush2.bf16.msra.mxu0 0
    %793 = vmatprep.subr.bf16.mxu0 0
    %794 = vmatpush2.bf16.msra.mxu0 0
    %795 = vmatprep.subr.bf16.mxu0 0
    %796 = vmatpush2.bf16.msra.mxu0 0
    %797 = vmatprep.subr.bf16.mxu0 0
    %798 = vmatpush2.bf16.msra.mxu0 0
    %799 = vmatprep.subr.bf16.mxu0 0
    %800 = vmatpush2.bf16.msra.mxu0 0
    %801 = vmatprep.subr.bf16.mxu0 0
    %802 = vmatpush2.bf16.msra.mxu0 0
    %803 = vmatprep.subr.bf16.mxu0 0
    %804 = vmatpush2.bf16.msra.mxu0 0
    %805 = vmatprep.subr.bf16.mxu0 0
    %806 = vmatpush2.bf16.msra.mxu0 0
    %807 = vmatprep.mubr.bf16.mxu0 0
    %808 = vmatmul.mubr.bf16.gmra.mxu0 %v703
    %v809 = vpop.f32.mrf.mxu0
    %v810 = vadd.f32 %v725, %v809
    %v811 = vpop.f32.mrf.mxu0
    %v812 = vpop.f32.mrf.mxu0
    %v813 = vadd.f32 %v725, %v812
    %v814 = vpop.f32.mrf.mxu0
    %815 = vdwg.mxu0
    %v816 = vmax.f32 %v810, 0.0
    %v817 = vmax.f32 %v813, 0.0
    %v818 = vpack.c.bf16 %v817, %v816
    %v820 = vunpack.c.l.b16 %v818
    %v821 = vunpack.c.h.b16 %v818
    %v822 = vpack.c.b16 %v820, %v820
    %v823 = vpack.c.b16 %v821, %v821
    %826 = vst [vmem:[#allocation11] sm:$0xf] %v822
    %827 = vst [vmem:[#allocation11 + $0x4] sm:$0xf] %v823
    // Predicated region
    $region58: #{tpu_custom_call.1} parent=1 // pred_check
      _
    $region59: #{tpu_custom_call.1} parent=1 // pred_check_branch
      %829 = sbr.rel (0) target = $region61
    $region60: #{tpu_custom_call.1} parent=1 // pred_region
      %s831 = ssub.s32 128, 128
      %832 = vsyncadd [#allocation4], %s831
      %s833 = sshll.u32 [#allocation11], 4
      %s834 = int_to_ptr.vmem [resolvable:$true] %s833
      %839 = dma.vmem_to_hbm [thread:$0]  %s834, 128, %s9, [#allocation4], 64, 64, 4
    $region61: #{tpu_custom_call.1} parent=1 // pred_fallthru
      _
    // Predicated region
    $region62: #{tpu_custom_call.1} parent=1 // pred_check
      _
    $region63: #{tpu_custom_call.1} parent=1 // pred_check_branch
      %841 = sbr.rel (0) target = $region65
    $region64: #{tpu_custom_call.1} parent=1 // pred_region
      %842 = dma.done [#allocation4], 128
    $region65: #{tpu_custom_call.1} parent=1 // pred_fallthru
      _
    %843 = vsyncpa [#allocation3], 1
    %844 = vsyncpa [#allocation6], 1
    %845 = vsyncpa [#allocation9], 1
    %846 = vsyncpa [#allocation4], 1

</llo_original>
